<compile_context>
chip_gen: v7x
topology: tpu7x:2x2x1
jax: 0.10.0
libtpu: 0.0.40
codegen_flags: <defaults>
</compile_context>

<pallas_src>
import jax
import jax.numpy as jnp
from jax.experimental import pallas as pl
from jax.experimental.pallas import tpu as pltpu


def ae_forward_kernel(x_ref,
                      w1_ref, b1_ref,
                      w2_ref, b2_ref,
                      w21_ref, b21_ref,
                      w11_ref, b11_ref,
                      o_ref):
    """Full AE forward (encode + decode) for one batch tile, all in VMEM.

    encode: h1 = relu(x  @ W1  + b1)   [TB, D/2]
            h2 = relu(h1 @ W2  + b2)   [TB, H]
    decode: h3 = relu(h2 @ W21 + b21)  [TB, D/2]
            y  = relu(h3 @ W11 + b11)  [TB, D]

    Matmul operands are bf16 (MXU fast path on v5e/v6e/v7x); accumulation,
    bias-add and ReLU are f32.
    """
    x = x_ref[...].astype(jnp.bfloat16)

    h1 = jnp.dot(x, w1_ref[...], preferred_element_type=jnp.float32) + b1_ref[...]
    h1 = jnp.maximum(h1, 0.0).astype(jnp.bfloat16)

    h2 = jnp.dot(h1, w2_ref[...], preferred_element_type=jnp.float32) + b2_ref[...]
    h2 = jnp.maximum(h2, 0.0).astype(jnp.bfloat16)

    h3 = jnp.dot(h2, w21_ref[...], preferred_element_type=jnp.float32) + b21_ref[...]
    h3 = jnp.maximum(h3, 0.0).astype(jnp.bfloat16)

    y = jnp.dot(h3, w11_ref[...], preferred_element_type=jnp.float32) + b11_ref[...]
    y = jnp.maximum(y, 0.0)

    o_ref[...] = y.astype(o_ref.dtype)


def _pick_tile_b(B, max_tile=512):
    """Largest batch tile <= max_tile that divides B, preferring >=2 grid steps
    (so v7x's two TensorCores both get a 'parallel' step) once B is big enough
    to still fill the MXU M dimension per tile."""
    target = min(B, max_tile)
    if B >= 16:
        target = min(target, max(B // 2, 8))
    t = target
    while B % t != 0:
        t -= 1
    return t


def ae_forward(x, params, *, tile_b=None):
    """Run the AE forward pass via a single Pallas kernel, tiled over batch."""
    B, D = x.shape
    w1, b1, w2, b2, w21, b21, w11, b11 = params

    if tile_b is None:
        tile_b = _pick_tile_b(B)
    assert B % tile_b == 0, "batch must be divisible by tile_b"

    # bf16 weights for the MXU fast path; biases stay f32 (added post-accumulate).
    w1, w2, w21, w11 = (w.astype(jnp.bfloat16) for w in (w1, w2, w21, w11))
    b1, b2, b21, b11 = (b.astype(jnp.float32) for b in (b1, b2, b21, b11))
    weights = (w1, b1, w2, b2, w21, b21, w11, b11)

    # Explicit scoped-VMEM budget: double-buffered x/out tiles + resident
    # (double-buffered) weights, with headroom.  Matters mostly on v5e
    # (16 MiB default) if tile_b is scaled up aggressively.
    bytes_io = 2 * 2 * tile_b * D * x.dtype.itemsize          # x + out, 2-deep
    bytes_w = 2 * sum(int(a.size) * a.dtype.itemsize for a in weights)
    vmem_limit = int(min(max(2 * (bytes_io + bytes_w) + (4 << 20), 16 << 20),
                         48 << 20))

    # Weights/biases are small (<1 MiB total); keep each as a single full block
    # resident in VMEM across all batch tiles (index_map returns block 0 always).
    full = lambda arr: pl.BlockSpec(arr.shape, lambda i: (0,) * arr.ndim)

    return pl.pallas_call(
        ae_forward_kernel,
        out_shape=jax.ShapeDtypeStruct((B, D), x.dtype),
        grid_spec=pltpu.PrefetchScalarGridSpec(
            num_scalar_prefetch=0,
            grid=(B // tile_b,),
            in_specs=[
                pl.BlockSpec((tile_b, D), lambda i: (i, 0)),  # x batch tile
                full(w1), full(b1),
                full(w2), full(b2),
                full(w21), full(b21),
                full(w11), full(b11),
            ],
            out_specs=pl.BlockSpec((tile_b, D), lambda i: (i, 0)),
        ),
        compiler_params=pltpu.CompilerParams(
            dimension_semantics=("parallel",),
            vmem_limit_bytes=vmem_limit),
    )(x, *weights)


def init_ae_params(key, input_size, hidden_units=32, dtype=jnp.float32):
    """Deterministic synthetic init mimicking nn.Linear's U(-1/sqrt(fan_in), +)."""
    half = input_size // 2

    def linear(key, fan_in, fan_out):
        kw, kb = jax.random.split(key)
        bound = 1.0 / jnp.sqrt(fan_in)
        # stored as [in, out] (transposed vs PyTorch's [out, in])
        w = jax.random.uniform(kw, (fan_in, fan_out), dtype, -bound, bound)
        b = jax.random.uniform(kb, (1, fan_out), dtype, -bound, bound)
        return w, b

    k1, k2, k3, k4 = jax.random.split(key, 4)
    w1, b1 = linear(k1, input_size, half)      # fc1
    w2, b2 = linear(k2, half, hidden_units)    # fc2
    w21, b21 = linear(k3, hidden_units, half)  # fc21
    w11, b11 = linear(k4, half, input_size)    # fc11
    return (w1, b1, w2, b2, w21, b21, w11, b11)


def ae_forward_ref(x, params):
    """Pure-JAX f32 reference for correctness checking (matches the PyTorch AE:
    relu after every layer, including the final fc11)."""
    w1, b1, w2, b2, w21, b21, w11, b11 = params
    h = jnp.maximum(x @ w1 + b1, 0.0)
    h = jnp.maximum(h @ w2 + b2, 0.0)
    h = jnp.maximum(h @ w21 + b21, 0.0)
    h = jnp.maximum(h @ w11 + b11, 0.0)
    return h


if __name__ == "__main__":
    key = jax.random.PRNGKey(0)
    k_params, k_x = jax.random.split(key)

    batch = 256          # 2 grid steps of 128 rows each: fills MXU M, feeds both v7x TCs
    input_size = 256
    hidden_units = 32    # note: fc2/fc21 use only 32 of 128 lanes; negligible vs fc1/fc11

    params = init_ae_params(k_params, input_size, hidden_units)
    x = jax.random.normal(k_x, (batch, input_size), jnp.float32)

    out = ae_forward(x, params)
    out = jax.block_until_ready(out)

    ref = ae_forward_ref(x, params)
    assert out.shape == (batch, input_size)
    # bf16 matmul operands => relaxed tolerance vs the f32 reference.
    assert jnp.allclose(out, ref, atol=5e-2, rtol=5e-2), "mismatch vs reference"

    print("KERNEL_OK")
</pallas_src>

<mosaic_0001>
module attributes {stable_mosaic.version = 11 : i64} {
  func.func @ae_forward_kernel(%arg0: i32, %arg1: memref<128x256xf32, #tpu.memory_space<vmem>>, %arg2: memref<256x128xbf16, #tpu.memory_space<vmem>>, %arg3: memref<1x128xf32, #tpu.memory_space<vmem>>, %arg4: memref<128x32xbf16, #tpu.memory_space<vmem>>, %arg5: memref<1x32xf32, #tpu.memory_space<vmem>>, %arg6: memref<32x128xbf16, #tpu.memory_space<vmem>>, %arg7: memref<1x128xf32, #tpu.memory_space<vmem>>, %arg8: memref<128x256xbf16, #tpu.memory_space<vmem>>, %arg9: memref<1x256xf32, #tpu.memory_space<vmem>>, %arg10: memref<128x256xf32, #tpu.memory_space<vmem>>) attributes {dimension_semantics = [#tpu.dimension_semantics<parallel>], iteration_bounds = array<i64: 2>, scalar_prefetch = 0 : i64, scratch_operands = 0 : i64, tpu.core_type = #tpu.core_type<tc>, window_params = [{transform_indices = @transform_0, window_bounds = array<i64: 128, 256>}, {pipeline_mode = #tpu.pipeline_mode<synchronous>, transform_indices = @transform_1, window_bounds = array<i64: 256, 128>}, {pipeline_mode = #tpu.pipeline_mode<synchronous>, transform_indices = @transform_2, window_bounds = array<i64: 1, 128>}, {pipeline_mode = #tpu.pipeline_mode<synchronous>, transform_indices = @transform_3, window_bounds = array<i64: 128, 32>}, {pipeline_mode = #tpu.pipeline_mode<synchronous>, transform_indices = @transform_4, window_bounds = array<i64: 1, 32>}, {pipeline_mode = #tpu.pipeline_mode<synchronous>, transform_indices = @transform_5, window_bounds = array<i64: 32, 128>}, {pipeline_mode = #tpu.pipeline_mode<synchronous>, transform_indices = @transform_6, window_bounds = array<i64: 1, 128>}, {pipeline_mode = #tpu.pipeline_mode<synchronous>, transform_indices = @transform_7, window_bounds = array<i64: 128, 256>}, {pipeline_mode = #tpu.pipeline_mode<synchronous>, transform_indices = @transform_8, window_bounds = array<i64: 1, 256>}, {transform_indices = @transform_9, window_bounds = array<i64: 128, 256>}]} {
    %c0 = arith.constant 0 : index
    %c0_0 = arith.constant 0 : index
    %0 = vector.load %arg1[%c0, %c0_0] : memref<128x256xf32, #tpu.memory_space<vmem>>, vector<128x256xf32>
    %1 = arith.truncf %0 : vector<128x256xf32> to vector<128x256xbf16>
    %c0_1 = arith.constant 0 : index
    %c0_2 = arith.constant 0 : index
    %2 = vector.load %arg2[%c0_1, %c0_2] : memref<256x128xbf16, #tpu.memory_space<vmem>>, vector<256x128xbf16>
    %cst = arith.constant dense<0.000000e+00> : vector<128x128xf32>
    %3 = tpu.matmul %1, %2, %cst {dimension_numbers = #tpu.dot_dimension_numbers<[1], [0], [0], [1], [0, 0, 1, 1], [], []>} : vector<128x256xbf16>, vector<256x128xbf16>, vector<128x128xf32> -> vector<128x128xf32>
    %c0_3 = arith.constant 0 : index
    %c0_4 = arith.constant 0 : index
    %4 = vector.load %arg3[%c0_3, %c0_4] : memref<1x128xf32, #tpu.memory_space<vmem>>, vector<1x128xf32>
    %5 = vector.broadcast %4 : vector<1x128xf32> to vector<128x128xf32>
    %6 = arith.addf %3, %5 : vector<128x128xf32>
    %cst_5 = arith.constant 0.000000e+00 : f32
    %7 = vector.broadcast %cst_5 : f32 to vector<128x128xf32>
    %8 = arith.maximumf %6, %7 : vector<128x128xf32>
    %9 = arith.truncf %8 : vector<128x128xf32> to vector<128x128xbf16>
    %c0_6 = arith.constant 0 : index
    %c0_7 = arith.constant 0 : index
    %10 = vector.load %arg4[%c0_6, %c0_7] : memref<128x32xbf16, #tpu.memory_space<vmem>>, vector<128x32xbf16>
    %cst_8 = arith.constant dense<0.000000e+00> : vector<128x32xf32>
    %11 = tpu.matmul %9, %10, %cst_8 {dimension_numbers = #tpu.dot_dimension_numbers<[1], [0], [0], [1], [0, 0, 1, 1], [], []>} : vector<128x128xbf16>, vector<128x32xbf16>, vector<128x32xf32> -> vector<128x32xf32>
    %c0_9 = arith.constant 0 : index
    %c0_10 = arith.constant 0 : index
    %12 = vector.load %arg5[%c0_9, %c0_10] : memref<1x32xf32, #tpu.memory_space<vmem>>, vector<1x32xf32>
    %13 = vector.broadcast %12 : vector<1x32xf32> to vector<128x32xf32>
    %14 = arith.addf %11, %13 : vector<128x32xf32>
    %cst_11 = arith.constant 0.000000e+00 : f32
    %15 = vector.broadcast %cst_11 : f32 to vector<128x32xf32>
    %16 = arith.maximumf %14, %15 : vector<128x32xf32>
    %17 = arith.truncf %16 : vector<128x32xf32> to vector<128x32xbf16>
    %c0_12 = arith.constant 0 : index
    %c0_13 = arith.constant 0 : index
    %18 = vector.load %arg6[%c0_12, %c0_13] : memref<32x128xbf16, #tpu.memory_space<vmem>>, vector<32x128xbf16>
    %cst_14 = arith.constant dense<0.000000e+00> : vector<128x128xf32>
    %19 = tpu.matmul %17, %18, %cst_14 {dimension_numbers = #tpu.dot_dimension_numbers<[1], [0], [0], [1], [0, 0, 1, 1], [], []>} : vector<128x32xbf16>, vector<32x128xbf16>, vector<128x128xf32> -> vector<128x128xf32>
    %c0_15 = arith.constant 0 : index
    %c0_16 = arith.constant 0 : index
    %20 = vector.load %arg7[%c0_15, %c0_16] : memref<1x128xf32, #tpu.memory_space<vmem>>, vector<1x128xf32>
    %21 = vector.broadcast %20 : vector<1x128xf32> to vector<128x128xf32>
    %22 = arith.addf %19, %21 : vector<128x128xf32>
    %cst_17 = arith.constant 0.000000e+00 : f32
    %23 = vector.broadcast %cst_17 : f32 to vector<128x128xf32>
    %24 = arith.maximumf %22, %23 : vector<128x128xf32>
    %25 = arith.truncf %24 : vector<128x128xf32> to vector<128x128xbf16>
    %c0_18 = arith.constant 0 : index
    %c0_19 = arith.constant 0 : index
    %26 = vector.load %arg8[%c0_18, %c0_19] : memref<128x256xbf16, #tpu.memory_space<vmem>>, vector<128x256xbf16>
    %cst_20 = arith.constant dense<0.000000e+00> : vector<128x256xf32>
    %27 = tpu.matmul %25, %26, %cst_20 {dimension_numbers = #tpu.dot_dimension_numbers<[1], [0], [0], [1], [0, 0, 1, 1], [], []>} : vector<128x128xbf16>, vector<128x256xbf16>, vector<128x256xf32> -> vector<128x256xf32>
    %c0_21 = arith.constant 0 : index
    %c0_22 = arith.constant 0 : index
    %28 = vector.load %arg9[%c0_21, %c0_22] : memref<1x256xf32, #tpu.memory_space<vmem>>, vector<1x256xf32>
    %29 = vector.broadcast %28 : vector<1x256xf32> to vector<128x256xf32>
    %30 = arith.addf %27, %29 : vector<128x256xf32>
    %cst_23 = arith.constant 0.000000e+00 : f32
    %31 = vector.broadcast %cst_23 : f32 to vector<128x256xf32>
    %32 = arith.maximumf %30, %31 : vector<128x256xf32>
    %c0_24 = arith.constant 0 : index
    %c0_25 = arith.constant 0 : index
    %33 = vector.load %arg10[%c0_24, %c0_25] : memref<128x256xf32, #tpu.memory_space<vmem>>, vector<128x256xf32>
    tpu.vector_store %arg10[%c0_24, %c0_25], %32 {strides = array<i32>} : memref<128x256xf32, #tpu.memory_space<vmem>>, vector<128x256xf32>,
    return
  }
  func.func @transform_0(%arg0: i32) -> (i32, i32) {
    %c0_i32 = arith.constant 0 : i32
    %c0_i32_0 = arith.constant 0 : i32
    return %arg0, %c0_i32 : i32, i32
  }
  func.func @transform_1(%arg0: i32) -> (i32, i32) {
    %c0_i32 = arith.constant 0 : i32
    %c0_i32_0 = arith.constant 0 : i32
    %c0_i32_1 = arith.constant 0 : i32
    return %c0_i32, %c0_i32_0 : i32, i32
  }
  func.func @transform_2(%arg0: i32) -> (i32, i32) {
    %c0_i32 = arith.constant 0 : i32
    %c0_i32_0 = arith.constant 0 : i32
    %c0_i32_1 = arith.constant 0 : i32
    return %c0_i32, %c0_i32_0 : i32, i32
  }
  func.func @transform_3(%arg0: i32) -> (i32, i32) {
    %c0_i32 = arith.constant 0 : i32
    %c0_i32_0 = arith.constant 0 : i32
    %c0_i32_1 = arith.constant 0 : i32
    return %c0_i32, %c0_i32_0 : i32, i32
  }
  func.func @transform_4(%arg0: i32) -> (i32, i32) {
    %c0_i32 = arith.constant 0 : i32
    %c0_i32_0 = arith.constant 0 : i32
    %c0_i32_1 = arith.constant 0 : i32
    return %c0_i32, %c0_i32_0 : i32, i32
  }
  func.func @transform_5(%arg0: i32) -> (i32, i32) {
    %c0_i32 = arith.constant 0 : i32
    %c0_i32_0 = arith.constant 0 : i32
    %c0_i32_1 = arith.constant 0 : i32
    return %c0_i32, %c0_i32_0 : i32, i32
  }
  func.func @transform_6(%arg0: i32) -> (i32, i32) {
    %c0_i32 = arith.constant 0 : i32
    %c0_i32_0 = arith.constant 0 : i32
    %c0_i32_1 = arith.constant 0 : i32
    return %c0_i32, %c0_i32_0 : i32, i32
  }
  func.func @transform_7(%arg0: i32) -> (i32, i32) {
    %c0_i32 = arith.constant 0 : i32
    %c0_i32_0 = arith.constant 0 : i32
    %c0_i32_1 = arith.constant 0 : i32
    return %c0_i32, %c0_i32_0 : i32, i32
  }
  func.func @transform_8(%arg0: i32) -> (i32, i32) {
    %c0_i32 = arith.constant 0 : i32
    %c0_i32_0 = arith.constant 0 : i32
    %c0_i32_1 = arith.constant 0 : i32
    return %c0_i32, %c0_i32_0 : i32, i32
  }
  func.func @transform_9(%arg0: i32) -> (i32, i32) {
    %c0_i32 = arith.constant 0 : i32
    %c0_i32_0 = arith.constant 0 : i32
    return %arg0, %c0_i32 : i32, i32
  }
}

</mosaic_0001>

<llo_original>
// kernel: tpu_custom_call.1
$region0: #{tpu_custom_call.1}
  #allocation0 [shape = 'u32[]', space=smem, size = 0x4, offset = 0x4, fixed_abs, tag = 'smem constant byte address 0x4 - core index']
  #allocation1 [shape = 'u32[144,128]{1,0:T(1,128)}', space=vmem, size = 0x12000, scoped, tag = 'internal scratch']
  %s0 = inlined_call_operand.hbm [shape: f32[256,256], index: 0, kind: input, shape index: {}]
  %s1 = inlined_call_operand.hbm [shape: bf16[256,128], index: 1, kind: input, shape index: {}]
  %s2 = inlined_call_operand.vmem [shape: f32[1,128], index: 2, kind: input, shape index: {}]
  %s3 = inlined_call_operand.vmem [shape: bf16[128,32], index: 3, kind: input, shape index: {}]
  %s4 = inlined_call_operand.vmem [shape: f32[1,32], index: 4, kind: input, shape index: {}]
  %s5 = inlined_call_operand.vmem [shape: bf16[32,128], index: 5, kind: input, shape index: {}]
  %s6 = inlined_call_operand.vmem [shape: f32[1,128], index: 6, kind: input, shape index: {}]
  %s7 = inlined_call_operand.hbm [shape: bf16[128,256], index: 7, kind: input, shape index: {}]
  %s8 = inlined_call_operand.vmem [shape: f32[1,256], index: 8, kind: input, shape index: {}]
  %s9 = inlined_call_operand.hbm [shape: f32[256,256], index: 9, kind: output, shape index: {}]
  %s10 = sld [smem:[#allocation0]]
  $region81: #{tpu_custom_call.1} parent=0
    _
  %s12 = ssub.s32 1, %s10
  %s13 = scalar_select 0, %s12, %s10
  $region1: #{tpu_custom_call.1} parent=0
    #allocation2 [shape = 'u8[262144]{0}', space=vmem, size = 0x40000, scoped, tag = 'input window, operand 0']
    #allocation3 [shape = 's32[2]{0}', space=sflag, size = 0x8, scoped, tag = 'scoped memory for tpu_custom_call.1']
    #allocation4 [shape = 's32[2]{0}', space=sflag, size = 0x8, scoped, tag = 'scoped memory for tpu_custom_call.1']
    #allocation5 [shape = 'u8[65536]{0}', space=vmem, size = 0x10000, scoped, tag = 'input window, operand 1, single buffered']
    #allocation6 [shape = 's32[1]{0}', space=sflag, size = 0x4, scoped, tag = 'scoped memory for tpu_custom_call.1']
    #allocation7 [shape = 'u8[65536]{0}', space=vmem, size = 0x10000, scoped, tag = 'input window, operand 7, single buffered']
    #allocation8 [shape = 'u8[262144]{0}', space=vmem, size = 0x40000, scoped, tag = 'output window, operand 0']
    %14 = vsyncpa [#allocation3], 0
    %s15 = scalar_lea.sflag [#allocation3], 1
    %16 = vsyncpa %s15, 0
    %17 = vsyncpa [#allocation6], 0
    %18 = vsyncpa [#allocation4], 0
    %s19 = scalar_lea.sflag [#allocation4], 1
    %20 = vsyncpa %s19, 0
    loop: start=0, step=1, limit=4
    $region2: #{tpu_custom_call.1} parent=1 // loop_pre_header
      _
    $region3: #{tpu_custom_call.1} parent=1 // loop_header
      %s22 = sphi 0, %s26
      %p23 = scmp.ge.s32.totalorder %s22, 4
      %s32 = sphi 0, %s34
      %s35 = sphi 0, %s32
      %s36 = sphi 0, %s35
      %s52 = sphi 0, %s36
      %s56 = sphi 0, %s56
      %s58 = sphi 0, %s56
      %s59 = sphi 0, %s58
      %s73 = sphi 0, %s59
      %s77 = sphi 0, %s77
      %s79 = sphi 0, %s77
      %s80 = sphi 0, %s79
      %s94 = sphi 0, %s80
      %s98 = sphi 0, %s98
      %s100 = sphi 0, %s98
      %s101 = sphi 0, %s100
      %s115 = sphi 0, %s101
      %s119 = sphi 0, %s119
      %s121 = sphi 0, %s119
      %s122 = sphi 0, %s121
      %s136 = sphi 0, %s122
      %s140 = sphi 0, %s140
      %s142 = sphi 0, %s140
      %s143 = sphi 0, %s142
      %s157 = sphi 0, %s143
      %s161 = sphi 0, %s161
      %s163 = sphi 0, %s161
      %s164 = sphi 0, %s163
      %s178 = sphi 0, %s164
      %s182 = sphi 0, %s182
      %s184 = sphi 0, %s182
      %s185 = sphi 0, %s184
      %s199 = sphi 0, %s185
      %s203 = sphi 0, %s203
      %s205 = sphi 0, %s203
      %s206 = sphi 0, %s205
      %s220 = sphi 0, %s206
      %s226 = sphi 0, %s228
      %s229 = sphi 0, %s226
      %s230 = sphi 0, %s229
      %s246 = sphi 0, %s230
    $region4: #{tpu_custom_call.1} parent=1 // loop_header_branch
      %25 = sbr.rel (%p23) target = $region8
    $region5: #{tpu_custom_call.1} parent=1 // loop_body
      %s27 = ssub.s32 %s22, 1
      %s28 = ssub.s32 %s22, 2
      %s29 = sadd.s32 %s22, 1
      %s30 = ssub.s32 %s22, %s29
      %p31 = scmp.eq.s32.totalorder %s30, 0
      %s33 = sadd.s32 %s32, 1
      %s34 = scalar_select %p31, %s32, %s33
      %p37 = pneg %p31
      %p38 = scmp.eq.s32.totalorder %s22, 1
      %p39 = por %p37, %p38
      %p40 = scmp.ne.s32.totalorder %s32, %s35
      %p41 = scmp.eq.s32.totalorder %s22, 0
      %p42 = por %p40, %p41
      %p43 = scmp.ne.s32.totalorder %s32, %s35
      %p44 = scmp.eq.s32.totalorder %s27, 1
      %p45 = por %p43, %p44
      %p46 = scmp.ne.s32.totalorder %s35, %s36
      %p47 = scmp.eq.s32.totalorder %s27, 0
      %p48 = por %p46, %p47
      %p49 = scmp.ne.s32.totalorder %s35, %s36
      %p50 = scmp.eq.s32.totalorder %s28, 1
      %p51 = por %p49, %p50
      %p53 = scmp.ne.s32.totalorder %s36, %s52
      %p54 = scmp.eq.s32.totalorder %s28, 0
      %p55 = por %p53, %p54
      %s57 = sadd.s32 %s56, 1
      %p60 = scmp.eq.s32.totalorder %s22, 1
      %p61 = scmp.ne.s32.totalorder %s56, %s58
      %p62 = scmp.eq.s32.totalorder %s22, 0
      %p63 = por %p61, %p62
      %p64 = scmp.ne.s32.totalorder %s56, %s58
      %p65 = scmp.eq.s32.totalorder %s27, 1
      %p66 = por %p64, %p65
      %p67 = scmp.ne.s32.totalorder %s58, %s59
      %p68 = scmp.eq.s32.totalorder %s27, 0
      %p69 = por %p67, %p68
      %p70 = scmp.ne.s32.totalorder %s58, %s59
      %p71 = scmp.eq.s32.totalorder %s28, 1
      %p72 = por %p70, %p71
      %p74 = scmp.ne.s32.totalorder %s59, %s73
      %p75 = scmp.eq.s32.totalorder %s28, 0
      %p76 = por %p74, %p75
      %s78 = sadd.s32 %s77, 1
      %p81 = scmp.eq.s32.totalorder %s22, 1
      %p82 = scmp.ne.s32.totalorder %s77, %s79
      %p83 = scmp.eq.s32.totalorder %s22, 0
      %p84 = por %p82, %p83
      %p85 = scmp.ne.s32.totalorder %s77, %s79
      %p86 = scmp.eq.s32.totalorder %s27, 1
      %p87 = por %p85, %p86
      %p88 = scmp.ne.s32.totalorder %s79, %s80
      %p89 = scmp.eq.s32.totalorder %s27, 0
      %p90 = por %p88, %p89
      %p91 = scmp.ne.s32.totalorder %s79, %s80
      %p92 = scmp.eq.s32.totalorder %s28, 1
      %p93 = por %p91, %p92
      %p95 = scmp.ne.s32.totalorder %s80, %s94
      %p96 = scmp.eq.s32.totalorder %s28, 0
      %p97 = por %p95, %p96
      %s99 = sadd.s32 %s98, 1
      %p102 = scmp.eq.s32.totalorder %s22, 1
      %p103 = scmp.ne.s32.totalorder %s98, %s100
      %p104 = scmp.eq.s32.totalorder %s22, 0
      %p105 = por %p103, %p104
      %p106 = scmp.ne.s32.totalorder %s98, %s100
      %p107 = scmp.eq.s32.totalorder %s27, 1
      %p108 = por %p106, %p107
      %p109 = scmp.ne.s32.totalorder %s100, %s101
      %p110 = scmp.eq.s32.totalorder %s27, 0
      %p111 = por %p109, %p110
      %p112 = scmp.ne.s32.totalorder %s100, %s101
      %p113 = scmp.eq.s32.totalorder %s28, 1
      %p114 = por %p112, %p113
      %p116 = scmp.ne.s32.totalorder %s101, %s115
      %p117 = scmp.eq.s32.totalorder %s28, 0
      %p118 = por %p116, %p117
      %s120 = sadd.s32 %s119, 1
      %p123 = scmp.eq.s32.totalorder %s22, 1
      %p124 = scmp.ne.s32.totalorder %s119, %s121
      %p125 = scmp.eq.s32.totalorder %s22, 0
      %p126 = por %p124, %p125
      %p127 = scmp.ne.s32.totalorder %s119, %s121
      %p128 = scmp.eq.s32.totalorder %s27, 1
      %p129 = por %p127, %p128
      %p130 = scmp.ne.s32.totalorder %s121, %s122
      %p131 = scmp.eq.s32.totalorder %s27, 0
      %p132 = por %p130, %p131
      %p133 = scmp.ne.s32.totalorder %s121, %s122
      %p134 = scmp.eq.s32.totalorder %s28, 1
      %p135 = por %p133, %p134
      %p137 = scmp.ne.s32.totalorder %s122, %s136
      %p138 = scmp.eq.s32.totalorder %s28, 0
      %p139 = por %p137, %p138
      %s141 = sadd.s32 %s140, 1
      %p144 = scmp.eq.s32.totalorder %s22, 1
      %p145 = scmp.ne.s32.totalorder %s140, %s142
      %p146 = scmp.eq.s32.totalorder %s22, 0
      %p147 = por %p145, %p146
      %p148 = scmp.ne.s32.totalorder %s140, %s142
      %p149 = scmp.eq.s32.totalorder %s27, 1
      %p150 = por %p148, %p149
      %p151 = scmp.ne.s32.totalorder %s142, %s143
      %p152 = scmp.eq.s32.totalorder %s27, 0
      %p153 = por %p151, %p152
      %p154 = scmp.ne.s32.totalorder %s142, %s143
      %p155 = scmp.eq.s32.totalorder %s28, 1
      %p156 = por %p154, %p155
      %p158 = scmp.ne.s32.totalorder %s143, %s157
      %p159 = scmp.eq.s32.totalorder %s28, 0
      %p160 = por %p158, %p159
      %s162 = sadd.s32 %s161, 1
      %p165 = scmp.eq.s32.totalorder %s22, 1
      %p166 = scmp.ne.s32.totalorder %s161, %s163
      %p167 = scmp.eq.s32.totalorder %s22, 0
      %p168 = por %p166, %p167
      %p169 = scmp.ne.s32.totalorder %s161, %s163
      %p170 = scmp.eq.s32.totalorder %s27, 1
      %p171 = por %p169, %p170
      %p172 = scmp.ne.s32.totalorder %s163, %s164
      %p173 = scmp.eq.s32.totalorder %s27, 0
      %p174 = por %p172, %p173
      %p175 = scmp.ne.s32.totalorder %s163, %s164
      %p176 = scmp.eq.s32.totalorder %s28, 1
      %p177 = por %p175, %p176
      %p179 = scmp.ne.s32.totalorder %s164, %s178
      %p180 = scmp.eq.s32.totalorder %s28, 0
      %p181 = por %p179, %p180
      %s183 = sadd.s32 %s182, 1
      %p186 = scmp.eq.s32.totalorder %s22, 1
      %p187 = scmp.ne.s32.totalorder %s182, %s184
      %p188 = scmp.eq.s32.totalorder %s22, 0
      %p189 = por %p187, %p188
      %p190 = scmp.ne.s32.totalorder %s182, %s184
      %p191 = scmp.eq.s32.totalorder %s27, 1
      %p192 = por %p190, %p191
      %p193 = scmp.ne.s32.totalorder %s184, %s185
      %p194 = scmp.eq.s32.totalorder %s27, 0
      %p195 = por %p193, %p194
      %p196 = scmp.ne.s32.totalorder %s184, %s185
      %p197 = scmp.eq.s32.totalorder %s28, 1
      %p198 = por %p196, %p197
      %p200 = scmp.ne.s32.totalorder %s185, %s199
      %p201 = scmp.eq.s32.totalorder %s28, 0
      %p202 = por %p200, %p201
      %s204 = sadd.s32 %s203, 1
      %p207 = scmp.eq.s32.totalorder %s22, 1
      %p208 = scmp.ne.s32.totalorder %s203, %s205
      %p209 = scmp.eq.s32.totalorder %s22, 0
      %p210 = por %p208, %p209
      %p211 = scmp.ne.s32.totalorder %s203, %s205
      %p212 = scmp.eq.s32.totalorder %s27, 1
      %p213 = por %p211, %p212
      %p214 = scmp.ne.s32.totalorder %s205, %s206
      %p215 = scmp.eq.s32.totalorder %s27, 0
      %p216 = por %p214, %p215
      %p217 = scmp.ne.s32.totalorder %s205, %s206
      %p218 = scmp.eq.s32.totalorder %s28, 1
      %p219 = por %p217, %p218
      %p221 = scmp.ne.s32.totalorder %s206, %s220
      %p222 = scmp.eq.s32.totalorder %s28, 0
      %p223 = por %p221, %p222
      %s224 = ssub.s32 %s22, %s29
      %p225 = scmp.eq.s32.totalorder %s224, 0
      %s227 = sadd.s32 %s226, 1
      %s228 = scalar_select %p225, %s226, %s227
      %p231 = pneg %p225
      %p232 = scmp.eq.s32.totalorder %s22, 1
      %p233 = por %p231, %p232
      %p234 = scmp.ne.s32.totalorder %s226, %s229
      %p235 = scmp.eq.s32.totalorder %s22, 0
      %p236 = por %p234, %p235
      %p237 = scmp.ne.s32.totalorder %s226, %s229
      %p238 = scmp.eq.s32.totalorder %s27, 1
      %p239 = por %p237, %p238
      %p240 = scmp.ne.s32.totalorder %s229, %s230
      %p241 = scmp.eq.s32.totalorder %s27, 0
      %p242 = por %p240, %p241
      %p243 = scmp.ne.s32.totalorder %s229, %s230
      %p244 = scmp.eq.s32.totalorder %s28, 1
      %p245 = por %p243, %p244
      %p247 = scmp.ne.s32.totalorder %s230, %s246
      %p248 = scmp.eq.s32.totalorder %s28, 0
      %p249 = por %p247, %p248
      %p250 = scmp.le.s32.totalorder 1, %s22
      %p251 = scmp.lt.s32.totalorder %s22, 3
      %p252 = pnand %p250, %p251
      %p253 = pneg %p252
      // Predicated region
      $region9: #{tpu_custom_call.1} parent=5 // pred_check
        _
      $region10: #{tpu_custom_call.1} parent=5 // pred_check_branch
        %255 = sbr.rel (%p252) target = $region12
      $region11: #{tpu_custom_call.1} parent=5 // pred_region
        %s256 = ssub.s32 %s22, 1
        // Predicated region
        $region13: #{tpu_custom_call.1} parent=11 // pred_check
          %p257 = pneg %p69
        $region14: #{tpu_custom_call.1} parent=11 // pred_check_branch
          %259 = sbr.rel (%p257) target = $region16
        $region15: #{tpu_custom_call.1} parent=11 // pred_region
          %s261 = ssub.s32 2048, 2048
          %262 = vsyncadd [#allocation6], %s261
          %s263 = sshll.u32 [#allocation5], 4
          %s264 = int_to_ptr.vmem [resolvable:$true] %s263
          %269 = dma.hbm_to_vmem [thread:$0]  %s1, 2048, %s264, [#allocation6], 64, 64, 4
        $region16: #{tpu_custom_call.1} parent=11 // pred_fallthru
          _
        // Predicated region
        $region17: #{tpu_custom_call.1} parent=11 // pred_check
          %p270 = pneg %p90
        $region18: #{tpu_custom_call.1} parent=11 // pred_check_branch
          %272 = sbr.rel (%p270) target = $region20
        $region19: #{tpu_custom_call.1} parent=11 // pred_region
          _
        $region20: #{tpu_custom_call.1} parent=11 // pred_fallthru
          _
        // Predicated region
        $region21: #{tpu_custom_call.1} parent=11 // pred_check
          %p273 = pneg %p111
        $region22: #{tpu_custom_call.1} parent=11 // pred_check_branch
          %275 = sbr.rel (%p273) target = $region24
        $region23: #{tpu_custom_call.1} parent=11 // pred_region
          _
        $region24: #{tpu_custom_call.1} parent=11 // pred_fallthru
          _
        // Predicated region
        $region25: #{tpu_custom_call.1} parent=11 // pred_check
          %p276 = pneg %p132
        $region26: #{tpu_custom_call.1} parent=11 // pred_check_branch
          %278 = sbr.rel (%p276) target = $region28
        $region27: #{tpu_custom_call.1} parent=11 // pred_region
          _
        $region28: #{tpu_custom_call.1} parent=11 // pred_fallthru
          _
        // Predicated region
        $region29: #{tpu_custom_call.1} parent=11 // pred_check
          %p279 = pneg %p153
        $region30: #{tpu_custom_call.1} parent=11 // pred_check_branch
          %281 = sbr.rel (%p279) target = $region32
        $region31: #{tpu_custom_call.1} parent=11 // pred_region
          _
        $region32: #{tpu_custom_call.1} parent=11 // pred_fallthru
          _
        // Predicated region
        $region33: #{tpu_custom_call.1} parent=11 // pred_check
          %p282 = pneg %p174
        $region34: #{tpu_custom_call.1} parent=11 // pred_check_branch
          %284 = sbr.rel (%p282) target = $region36
        $region35: #{tpu_custom_call.1} parent=11 // pred_region
          _
        $region36: #{tpu_custom_call.1} parent=11 // pred_fallthru
          _
        // Predicated region
        $region37: #{tpu_custom_call.1} parent=11 // pred_check
          %p285 = pneg %p195
        $region38: #{tpu_custom_call.1} parent=11 // pred_check_branch
          %287 = sbr.rel (%p285) target = $region40
        $region39: #{tpu_custom_call.1} parent=11 // pred_region
          %s289 = ssub.s32 2048, 2048
          %290 = vsyncadd [#allocation6], %s289
          %s291 = sshll.u32 [#allocation7], 4
          %s292 = int_to_ptr.vmem [resolvable:$true] %s291
          %297 = dma.hbm_to_vmem [thread:$0]  %s7, 2048, %s292, [#allocation6], 128, 128, 8
        $region40: #{tpu_custom_call.1} parent=11 // pred_fallthru
          _
        // Predicated region
        $region41: #{tpu_custom_call.1} parent=11 // pred_check
          %p298 = pneg %p216
        $region42: #{tpu_custom_call.1} parent=11 // pred_check_branch
          %300 = sbr.rel (%p298) target = $region44
        $region43: #{tpu_custom_call.1} parent=11 // pred_region
          _
        $region44: #{tpu_custom_call.1} parent=11 // pred_fallthru
          _
      $region12: #{tpu_custom_call.1} parent=5 // pred_fallthru
        _
      %p301 = scmp.lt.s32.totalorder %s22, 2
      // Predicated region
      $region45: #{tpu_custom_call.1} parent=5 // pred_check
        %p302 = pneg %p301
      $region46: #{tpu_custom_call.1} parent=5 // pred_check_branch
        %304 = sbr.rel (%p302) target = $region48
      $region47: #{tpu_custom_call.1} parent=5 // pred_region
        // Predicated region
        $region49: #{tpu_custom_call.1} parent=47 // pred_check
          %p305 = pneg %p42
        $region50: #{tpu_custom_call.1} parent=47 // pred_check_branch
          %307 = sbr.rel (%p305) target = $region52
        $region51: #{tpu_custom_call.1} parent=47 // pred_region
          %s308 = sand.u32 %s32, 1
          %s309 = scalar_lea.sflag [#allocation3], %s308
          %s310 = sand.u32 %s32, 1
          %s311 = smul.addr %s310, 256
          %s312 = scalar_lea.vmem [#allocation2], %s311
          %s313 = smul.u32 16, %s22
          %s315 = ssub.s32 4096, 4096
          %316 = vsyncadd %s309, %s315
          %s317 = smul.addr %s313, 2
          %s318 = smul.addr %s317, 128
          %s319 = scalar_lea.hbm %s0, %s318
          %s320 = sshll.u32 %s312, 4
          %s321 = int_to_ptr.vmem [resolvable:$true] %s320
          %326 = dma.hbm_to_vmem [thread:$0]  %s319, 4096, %s321, %s309, 256, 256, 16
        $region52: #{tpu_custom_call.1} parent=47 // pred_fallthru
          _
      $region48: #{tpu_custom_call.1} parent=5 // pred_fallthru
        _
      %p327 = scmp.le.s32.totalorder 1, %s22
      %p328 = scmp.lt.s32.totalorder %s22, 3
      %p329 = pnand %p327, %p328
      %p330 = pneg %p329
      // Predicated region
      $region53: #{tpu_custom_call.1} parent=5 // pred_check
        _
      $region54: #{tpu_custom_call.1} parent=5 // pred_check_branch
        %332 = sbr.rel (%p329) target = $region56
      $region55: #{tpu_custom_call.1} parent=5 // pred_region
        %s333 = ssub.s32 %s22, 1
        %s334 = sand.u32 %s35, 1
        %s335 = scalar_lea.sflag [#allocation3], %s334
        %s336 = sand.u32 %s35, 1
        %s337 = smul.addr %s336, 256
        %s338 = scalar_lea.vmem [#allocation2], %s337
        // Predicated region
        $region57: #{tpu_custom_call.1} parent=55 // pred_check
          %p339 = pneg %p48
        $region58: #{tpu_custom_call.1} parent=55 // pred_check_branch
          %341 = sbr.rel (%p339) target = $region60
        $region59: #{tpu_custom_call.1} parent=55 // pred_region
          %342 = dma.done %s335, 4096
        $region60: #{tpu_custom_call.1} parent=55 // pred_fallthru
          _
        // Predicated region
        $region61: #{tpu_custom_call.1} parent=55 // pred_check
          %p343 = pneg %p69
        $region62: #{tpu_custom_call.1} parent=55 // pred_check_branch
          %345 = sbr.rel (%p343) target = $region64
        $region63: #{tpu_custom_call.1} parent=55 // pred_region
          %346 = dma.done [#allocation6], 2048
        $region64: #{tpu_custom_call.1} parent=55 // pred_fallthru
          _
        // Predicated region
        $region65: #{tpu_custom_call.1} parent=55 // pred_check
          %p347 = pneg %p195
        $region66: #{tpu_custom_call.1} parent=55 // pred_check_branch
          %349 = sbr.rel (%p347) target = $region68
        $region67: #{tpu_custom_call.1} parent=55 // pred_region
          %350 = dma.done [#allocation6], 2048
        $region68: #{tpu_custom_call.1} parent=55 // pred_fallthru
          _
        %s351 = sand.u32 %s35, 1
        %s352 = scalar_lea.sflag [#allocation3], %s351
        %s353 = sand.u32 %s35, 1
        %s354 = smul.addr %s353, 256
        %s355 = scalar_lea.vmem [#allocation2], %s354
        %p356 = pneg %p48
        %p357 = pneg %p45
        %p358 = pneg %p69
        %p359 = pneg %p66
        %p360 = pneg %p90
        %p361 = pneg %p87
        %p362 = pneg %p111
        %p363 = pneg %p108
        %p364 = pneg %p132
        %p365 = pneg %p129
        %p366 = pneg %p153
        %p367 = pneg %p150
        %p368 = pneg %p174
        %p369 = pneg %p171
        %p370 = pneg %p195
        %p371 = pneg %p192
        %p372 = pneg %p216
        %p373 = pneg %p213
        %p374 = pneg %p242
        %p375 = pneg %p239
        %s376 = sand.u32 %s229, 1
        %s377 = scalar_lea.sflag [#allocation4], %s376
        %s378 = sand.u32 %s229, 1
        %s379 = smul.addr %s378, 256
        %s380 = scalar_lea.vmem [#allocation8], %s379
        %s381 = smul.u32 16, %s27
        %s382 = smul.u32 16, %s27
        %v384 = vld [vmem:[%s338] sm:$0xff]
        %v385 = vld [vmem:[%s338 + $0x8] sm:$0xff]
        %v386 = vld [vmem:[%s338 + $0x10] sm:$0xff]
        %v387 = vld [vmem:[%s338 + $0x18] sm:$0xff]
        %v388 = vld [vmem:[%s338 + $0x20] sm:$0xff]
        %v389 = vld [vmem:[%s338 + $0x28] sm:$0xff]
        %v390 = vld [vmem:[%s338 + $0x30] sm:$0xff]
        %v391 = vld [vmem:[%s338 + $0x38] sm:$0xff]
        %v392 = vld [vmem:[%s338 + $0x40] sm:$0xff]
        %v393 = vld [vmem:[%s338 + $0x48] sm:$0xff]
        %v394 = vld [vmem:[%s338 + $0x50] sm:$0xff]
        %v395 = vld [vmem:[%s338 + $0x58] sm:$0xff]
        %v396 = vld [vmem:[%s338 + $0x60] sm:$0xff]
        %v397 = vld [vmem:[%s338 + $0x68] sm:$0xff]
        %v398 = vld [vmem:[%s338 + $0x70] sm:$0xff]
        %v399 = vld [vmem:[%s338 + $0x78] sm:$0xff]
        %v400 = vld [vmem:[%s338 + $0x80] sm:$0xff]
        %v401 = vld [vmem:[%s338 + $0x88] sm:$0xff]
        %v402 = vld [vmem:[%s338 + $0x90] sm:$0xff]
        %v403 = vld [vmem:[%s338 + $0x98] sm:$0xff]
        %v404 = vld [vmem:[%s338 + $0xa0] sm:$0xff]
        %v405 = vld [vmem:[%s338 + $0xa8] sm:$0xff]
        %v406 = vld [vmem:[%s338 + $0xb0] sm:$0xff]
        %v407 = vld [vmem:[%s338 + $0xb8] sm:$0xff]
        %v408 = vld [vmem:[%s338 + $0xc0] sm:$0xff]
        %v409 = vld [vmem:[%s338 + $0xc8] sm:$0xff]
        %v410 = vld [vmem:[%s338 + $0xd0] sm:$0xff]
        %v411 = vld [vmem:[%s338 + $0xd8] sm:$0xff]
        %v412 = vld [vmem:[%s338 + $0xe0] sm:$0xff]
        %v413 = vld [vmem:[%s338 + $0xe8] sm:$0xff]
        %v414 = vld [vmem:[%s338 + $0xf0] sm:$0xff]
        %v415 = vld [vmem:[%s338 + $0xf8] sm:$0xff]
        %v416 = vpack.c.bf16 %v386, %v384
        %v417 = vpack.c.bf16 %v387, %v385
        %v418 = vpack.c.bf16 %v390, %v388
        %v419 = vpack.c.bf16 %v391, %v389
        %v420 = vpack.c.bf16 %v394, %v392
        %v421 = vpack.c.bf16 %v395, %v393
        %v422 = vpack.c.bf16 %v398, %v396
        %v423 = vpack.c.bf16 %v399, %v397
        %v424 = vpack.c.bf16 %v402, %v400
        %v425 = vpack.c.bf16 %v403, %v401
        %v426 = vpack.c.bf16 %v406, %v404
        %v427 = vpack.c.bf16 %v407, %v405
        %v428 = vpack.c.bf16 %v410, %v408
        %v429 = vpack.c.bf16 %v411, %v409
        %v430 = vpack.c.bf16 %v414, %v412
        %v431 = vpack.c.bf16 %v415, %v413
        %v432 = vld [vmem:[#allocation5] sm:$0xf]
        %v433 = vld [vmem:[#allocation5 + $0x4] sm:$0xf]
        %v434 = vld [vmem:[#allocation5 + $0x8] sm:$0xf]
        %v435 = vld [vmem:[#allocation5 + $0xc] sm:$0xf]
        %v436 = vld [vmem:[#allocation5 + $0x10] sm:$0xf]
        %v437 = vld [vmem:[#allocation5 + $0x14] sm:$0xf]
        %v438 = vld [vmem:[#allocation5 + $0x18] sm:$0xf]
        %v439 = vld [vmem:[#allocation5 + $0x1c] sm:$0xf]
        %v440 = vld [vmem:[#allocation5 + $0x20] sm:$0xf]
        %v441 = vld [vmem:[#allocation5 + $0x24] sm:$0xf]
        %v442 = vld [vmem:[#allocation5 + $0x28] sm:$0xf]
        %v443 = vld [vmem:[#allocation5 + $0x2c] sm:$0xf]
        %v444 = vld [vmem:[#allocation5 + $0x30] sm:$0xf]
        %v445 = vld [vmem:[#allocation5 + $0x34] sm:$0xf]
        %v446 = vld [vmem:[#allocation5 + $0x38] sm:$0xf]
        %v447 = vld [vmem:[#allocation5 + $0x3c] sm:$0xf]
        %v448 = vld [vmem:[#allocation5 + $0x40] sm:$0xf]
        %v449 = vld [vmem:[#allocation5 + $0x44] sm:$0xf]
        %v450 = vld [vmem:[#allocation5 + $0x48] sm:$0xf]
        %v451 = vld [vmem:[#allocation5 + $0x4c] sm:$0xf]
        %v452 = vld [vmem:[#allocation5 + $0x50] sm:$0xf]
        %v453 = vld [vmem:[#allocation5 + $0x54] sm:$0xf]
        %v454 = vld [vmem:[#allocation5 + $0x58] sm:$0xf]
        %v455 = vld [vmem:[#allocation5 + $0x5c] sm:$0xf]
        %v456 = vld [vmem:[#allocation5 + $0x60] sm:$0xf]
        %v457 = vld [vmem:[#allocation5 + $0x64] sm:$0xf]
        %v458 = vld [vmem:[#allocation5 + $0x68] sm:$0xf]
        %v459 = vld [vmem:[#allocation5 + $0x6c] sm:$0xf]
        %v460 = vld [vmem:[#allocation5 + $0x70] sm:$0xf]
        %v461 = vld [vmem:[#allocation5 + $0x74] sm:$0xf]
        %v462 = vld [vmem:[#allocation5 + $0x78] sm:$0xf]
        %v463 = vld [vmem:[#allocation5 + $0x7c] sm:$0xf]
        %v464 = vld [vmem:[%s2] sm:$0x1]
        %v466 = vlaneseq
        %v467 = vshrl.u32 %v466, 7
        %v468 = vsub.s32 0, %v467
        %v469 = vrot.slane %v464, %v468
        %v503 = vunpack.c.l.b16 %v432
        %v504 = vunpack.c.l.b16 %v433
        %v505 = vunpack.c.l.b16 %v434
        %v506 = vunpack.c.l.b16 %v435
        %v507 = vunpack.c.l.b16 %v436
        %v508 = vunpack.c.l.b16 %v437
        %v509 = vunpack.c.l.b16 %v438
        %v510 = vunpack.c.l.b16 %v439
        %v511 = vunpack.c.l.b16 %v440
        %v512 = vunpack.c.l.b16 %v441
        %v513 = vunpack.c.l.b16 %v442
        %v514 = vunpack.c.l.b16 %v443
        %v515 = vunpack.c.l.b16 %v444
        %v516 = vunpack.c.l.b16 %v445
        %v517 = vunpack.c.l.b16 %v446
        %v518 = vunpack.c.l.b16 %v447
        %v519 = vunpack.c.l.b16 %v448
        %v520 = vunpack.c.l.b16 %v449
        %v521 = vunpack.c.l.b16 %v450
        %v522 = vunpack.c.l.b16 %v451
        %v523 = vunpack.c.l.b16 %v452
        %v524 = vunpack.c.l.b16 %v453
        %v525 = vunpack.c.l.b16 %v454
        %v526 = vunpack.c.l.b16 %v455
        %v527 = vunpack.c.l.b16 %v456
        %v528 = vunpack.c.l.b16 %v457
        %v529 = vunpack.c.l.b16 %v458
        %v530 = vunpack.c.l.b16 %v459
        %v531 = vunpack.c.l.b16 %v460
        %v532 = vunpack.c.l.b16 %v461
        %v533 = vunpack.c.l.b16 %v462
        %v534 = vunpack.c.l.b16 %v463
        %v535 = vpack.c.b16 %v504, %v503
        %v536 = vpack.c.b16 %v506, %v505
        %v537 = vpack.c.b16 %v508, %v507
        %v538 = vpack.c.b16 %v510, %v509
        %v539 = vpack.c.b16 %v512, %v511
        %v540 = vpack.c.b16 %v514, %v513
        %v541 = vpack.c.b16 %v516, %v515
        %v542 = vpack.c.b16 %v518, %v517
        %v543 = vpack.c.b16 %v520, %v519
        %v544 = vpack.c.b16 %v522, %v521
        %v545 = vpack.c.b16 %v524, %v523
        %v546 = vpack.c.b16 %v526, %v525
        %v547 = vpack.c.b16 %v528, %v527
        %v548 = vpack.c.b16 %v530, %v529
        %v549 = vpack.c.b16 %v532, %v531
        %v550 = vpack.c.b16 %v534, %v533
        %567 = vmatprep.subr.bf16.mxu0 0
        %568 = vmatpush1.bf16.msra.mxu0 %v535
        %569 = vmatprep.subr.bf16.mxu0 0
        %570 = vmatpush1.bf16.msra.mxu0 %v536
        %571 = vmatprep.subr.bf16.mxu0 0
        %572 = vmatpush1.bf16.msra.mxu0 %v537
        %573 = vmatprep.subr.bf16.mxu0 0
        %574 = vmatpush1.bf16.msra.mxu0 %v538
        %575 = vmatprep.subr.bf16.mxu0 0
        %576 = vmatpush1.bf16.msra.mxu0 %v539
        %577 = vmatprep.subr.bf16.mxu0 0
        %578 = vmatpush1.bf16.msra.mxu0 %v540
        %579 = vmatprep.subr.bf16.mxu0 0
        %580 = vmatpush1.bf16.msra.mxu0 %v541
        %581 = vmatprep.subr.bf16.mxu0 0
        %582 = vmatpush1.bf16.msra.mxu0 %v542
        %583 = vmatprep.subr.bf16.mxu0 0
        %584 = vmatpush1.bf16.msra.mxu0 %v543
        %585 = vmatprep.subr.bf16.mxu0 0
        %586 = vmatpush1.bf16.msra.mxu0 %v544
        %587 = vmatprep.subr.bf16.mxu0 0
        %588 = vmatpush1.bf16.msra.mxu0 %v545
        %589 = vmatprep.subr.bf16.mxu0 0
        %590 = vmatpush1.bf16.msra.mxu0 %v546
        %591 = vmatprep.subr.bf16.mxu0 0
        %592 = vmatpush1.bf16.msra.mxu0 %v547
        %593 = vmatprep.subr.bf16.mxu0 0
        %594 = vmatpush1.bf16.msra.mxu0 %v548
        %595 = vmatprep.subr.bf16.mxu0 0
        %596 = vmatpush1.bf16.msra.mxu0 %v549
        %597 = vmatprep.subr.bf16.mxu0 0
        %598 = vmatpush1.bf16.msra.mxu0 %v550
        %599 = vmatprep.mubr.bf16.mxu0 %v417
        %600 = vmatmul.mubr.bf16.gmra.mrb[0].mxu0 %v416
        %v601 = vpop.f32.mrb[0].mxu0
        %v602 = vadd.f32 %v469, %v601
        %v603 = vpop.f32.mrb[0].mxu0
        %v604 = vpop.f32.mrb[0].mxu0
        %v605 = vadd.f32 %v469, %v604
        %v606 = vpop.f32.mrb[0].mxu0
        %607 = vmatprep.mubr.bf16.mxu0 %v419
        %608 = vmatmul.mubr.bf16.gmra.mrb[0].mxu0 %v418
        %v609 = vpop.f32.mrb[0].mxu0
        %v610 = vadd.f32 %v469, %v609
        %v611 = vpop.f32.mrb[0].mxu0
        %v612 = vpop.f32.mrb[0].mxu0
        %v613 = vadd.f32 %v469, %v612
        %v614 = vpop.f32.mrb[0].mxu0
        %615 = vmatprep.mubr.bf16.mxu0 %v421
        %616 = vmatmul.mubr.bf16.gmra.mrb[0].mxu0 %v420
        %v617 = vpop.f32.mrb[0].mxu0
        %v618 = vadd.f32 %v469, %v617
        %v619 = vpop.f32.mrb[0].mxu0
        %v620 = vpop.f32.mrb[0].mxu0
        %v621 = vadd.f32 %v469, %v620
        %v622 = vpop.f32.mrb[0].mxu0
        %623 = vmatprep.mubr.bf16.mxu0 %v423
        %624 = vmatmul.mubr.bf16.gmra.mrb[0].mxu0 %v422
        %v625 = vpop.f32.mrb[0].mxu0
        %v626 = vadd.f32 %v469, %v625
        %v627 = vpop.f32.mrb[0].mxu0
        %v628 = vpop.f32.mrb[0].mxu0
        %v629 = vadd.f32 %v469, %v628
        %v630 = vpop.f32.mrb[0].mxu0
        %631 = vmatprep.mubr.bf16.mxu0 %v425
        %632 = vmatmul.mubr.bf16.gmra.mrb[0].mxu0 %v424
        %v633 = vpop.f32.mrb[0].mxu0
        %v634 = vadd.f32 %v469, %v633
        %v635 = vpop.f32.mrb[0].mxu0
        %v636 = vpop.f32.mrb[0].mxu0
        %v637 = vadd.f32 %v469, %v636
        %v638 = vpop.f32.mrb[0].mxu0
        %639 = vmatprep.mubr.bf16.mxu0 %v427
        %640 = vmatmul.mubr.bf16.gmra.mrb[0].mxu0 %v426
        %v641 = vpop.f32.mrb[0].mxu0
        %v642 = vadd.f32 %v469, %v641
        %v643 = vpop.f32.mrb[0].mxu0
        %v644 = vpop.f32.mrb[0].mxu0
        %v645 = vadd.f32 %v469, %v644
        %v646 = vpop.f32.mrb[0].mxu0
        %647 = vmatprep.mubr.bf16.mxu0 %v429
        %648 = vmatmul.mubr.bf16.gmra.mrb[0].mxu0 %v428
        %v649 = vpop.f32.mrb[0].mxu0
        %v650 = vadd.f32 %v469, %v649
        %v651 = vpop.f32.mrb[0].mxu0
        %v652 = vpop.f32.mrb[0].mxu0
        %v653 = vadd.f32 %v469, %v652
        %v654 = vpop.f32.mrb[0].mxu0
        %655 = vmatprep.mubr.bf16.mxu0 %v431
        %656 = vmatmul.mubr.bf16.gmra.mrb[0].mxu0 %v430
        %v657 = vpop.f32.mrb[0].mxu0
        %v658 = vadd.f32 %v469, %v657
        %v659 = vpop.f32.mrb[0].mxu0
        %v660 = vpop.f32.mrb[0].mxu0
        %v661 = vadd.f32 %v469, %v660
        %v662 = vpop.f32.mrb[0].mxu0
        %663 = vdwg.mxu0
        %v664 = vmax.f32 %v602, 0.0
        %v665 = vmax.f32 %v605, 0.0
        %v666 = vmax.f32 %v610, 0.0
        %v667 = vmax.f32 %v613, 0.0
        %v668 = vmax.f32 %v618, 0.0
        %v669 = vmax.f32 %v621, 0.0
        %v670 = vmax.f32 %v626, 0.0
        %v671 = vmax.f32 %v629, 0.0
        %v672 = vmax.f32 %v634, 0.0
        %v673 = vmax.f32 %v637, 0.0
        %v674 = vmax.f32 %v642, 0.0
        %v675 = vmax.f32 %v645, 0.0
        %v676 = vmax.f32 %v650, 0.0
        %v677 = vmax.f32 %v653, 0.0
        %v678 = vmax.f32 %v658, 0.0
        %v679 = vmax.f32 %v661, 0.0
        %v680 = vpack.c.bf16 %v665, %v664
        %v681 = vpack.c.bf16 %v667, %v666
        %v682 = vpack.c.bf16 %v669, %v668
        %v683 = vpack.c.bf16 %v671, %v670
        %v684 = vpack.c.bf16 %v673, %v672
        %v685 = vpack.c.bf16 %v675, %v674
        %v686 = vpack.c.bf16 %v677, %v676
        %v687 = vpack.c.bf16 %v679, %v678
        %v688 = vld [vmem:[%s3] sm:$0xf]
        %v689 = vld [vmem:[%s3 + $0x4] sm:$0xf]
        %v690 = vld [vmem:[%s3 + $0x8] sm:$0xf]
        %v691 = vld [vmem:[%s3 + $0xc] sm:$0xf]
        %v692 = vld [vmem:[%s3 + $0x10] sm:$0xf]
        %v693 = vld [vmem:[%s3 + $0x14] sm:$0xf]
        %v694 = vld [vmem:[%s3 + $0x18] sm:$0xf]
        %v695 = vld [vmem:[%s3 + $0x1c] sm:$0xf]
        %v696 = vld [vmem:[%s3 + $0x20] sm:$0xf]
        %v697 = vld [vmem:[%s3 + $0x24] sm:$0xf]
        %v698 = vld [vmem:[%s3 + $0x28] sm:$0xf]
        %v699 = vld [vmem:[%s3 + $0x2c] sm:$0xf]
        %v700 = vld [vmem:[%s3 + $0x30] sm:$0xf]
        %v701 = vld [vmem:[%s3 + $0x34] sm:$0xf]
        %v702 = vld [vmem:[%s3 + $0x38] sm:$0xf]
        %v703 = vld [vmem:[%s3 + $0x3c] sm:$0xf]
        %v704 = vld [vmem:[%s4] sm:$0x1]
        %v706 = vlaneseq
        %v707 = vshrl.u32 %v706, 7
        %v708 = vsub.s32 0, %v707
        %v709 = vrot.slane %v704, %v708
        %v727 = vunpack.c.l.b16 %v688
        %v728 = vunpack.c.l.b16 %v689
        %v729 = vunpack.c.l.b16 %v690
        %v730 = vunpack.c.l.b16 %v691
        %v731 = vunpack.c.l.b16 %v692
        %v732 = vunpack.c.l.b16 %v693
        %v733 = vunpack.c.l.b16 %v694
        %v734 = vunpack.c.l.b16 %v695
        %v735 = vunpack.c.l.b16 %v696
        %v736 = vunpack.c.l.b16 %v697
        %v737 = vunpack.c.l.b16 %v698
        %v738 = vunpack.c.l.b16 %v699
        %v739 = vunpack.c.l.b16 %v700
        %v740 = vunpack.c.l.b16 %v701
        %v741 = vunpack.c.l.b16 %v702
        %v742 = vunpack.c.l.b16 %v703
        %v743 = vpack.c.b16 %v728, %v727
        %v744 = vpack.c.b16 %v730, %v729
        %v745 = vpack.c.b16 %v732, %v731
        %v746 = vpack.c.b16 %v734, %v733
        %v747 = vpack.c.b16 %v736, %v735
        %v748 = vpack.c.b16 %v738, %v737
        %v749 = vpack.c.b16 %v740, %v739
        %v750 = vpack.c.b16 %v742, %v741
        %759 = vmatprep.subr.bf16.mxu0 0
        %760 = vmatpush1.bf16.msra.mxu0 %v743
        %761 = vmatprep.subr.bf16.mxu0 0
        %762 = vmatpush1.bf16.msra.mxu0 %v744
        %763 = vmatprep.subr.bf16.mxu0 0
        %764 = vmatpush1.bf16.msra.mxu0 %v745
        %765 = vmatprep.subr.bf16.mxu0 0
        %766 = vmatpush1.bf16.msra.mxu0 %v746
        %767 = vmatprep.subr.bf16.mxu0 0
        %768 = vmatpush1.bf16.msra.mxu0 %v747
        %769 = vmatprep.subr.bf16.mxu0 0
        %770 = vmatpush1.bf16.msra.mxu0 %v748
        %771 = vmatprep.subr.bf16.mxu0 0
        %772 = vmatpush1.bf16.msra.mxu0 %v749
        %773 = vmatprep.subr.bf16.mxu0 0
        %774 = vmatpush1.bf16.msra.mxu0 %v750
        %775 = vmatprep.subr.bf16.mxu0 0
        %776 = vmatpush1.bf16.msra.mxu0 0
        %777 = vmatprep.subr.bf16.mxu0 0
        %778 = vmatpush1.bf16.msra.mxu0 0
        %779 = vmatprep.subr.bf16.mxu0 0
        %780 = vmatpush1.bf16.msra.mxu0 0
        %781 = vmatprep.subr.bf16.mxu0 0
        %782 = vmatpush1.bf16.msra.mxu0 0
        %783 = vmatprep.subr.bf16.mxu0 0
        %784 = vmatpush1.bf16.msra.mxu0 0
        %785 = vmatprep.subr.bf16.mxu0 0
        %786 = vmatpush1.bf16.msra.mxu0 0
        %787 = vmatprep.subr.bf16.mxu0 0
        %788 = vmatpush1.bf16.msra.mxu0 0
        %789 = vmatprep.subr.bf16.mxu0 0
        %790 = vmatpush1.bf16.msra.mxu0 0
        %791 = vmatprep.mubr.bf16.mxu0 0
        %792 = vmatmul.mubr.bf16.gmra.mrb[0].mxu0 %v680
        %v793 = vpop.f32.mrb[0].mxu0
        %v794 = vadd.f32 %v709, %v793
        %v795 = vpop.f32.mrb[0].mxu0
        %v796 = vpop.f32.mrb[0].mxu0
        %v797 = vadd.f32 %v709, %v796
        %v798 = vpop.f32.mrb[0].mxu0
        %799 = vmatprep.mubr.bf16.mxu0 0
        %800 = vmatmul.mubr.bf16.gmra.mrb[0].mxu0 %v681
        %v801 = vpop.f32.mrb[0].mxu0
        %v802 = vadd.f32 %v709, %v801
        %v803 = vpop.f32.mrb[0].mxu0
        %v804 = vpop.f32.mrb[0].mxu0
        %v805 = vadd.f32 %v709, %v804
        %v806 = vpop.f32.mrb[0].mxu0
        %807 = vmatprep.mubr.bf16.mxu0 0
        %808 = vmatmul.mubr.bf16.gmra.mrb[0].mxu0 %v682
        %v809 = vpop.f32.mrb[0].mxu0
        %v810 = vadd.f32 %v709, %v809
        %v811 = vpop.f32.mrb[0].mxu0
        %v812 = vpop.f32.mrb[0].mxu0
        %v813 = vadd.f32 %v709, %v812
        %v814 = vpop.f32.mrb[0].mxu0
        %815 = vmatprep.mubr.bf16.mxu0 0
        %816 = vmatmul.mubr.bf16.gmra.mrb[0].mxu0 %v683
        %v817 = vpop.f32.mrb[0].mxu0
        %v818 = vadd.f32 %v709, %v817
        %v819 = vpop.f32.mrb[0].mxu0
        %v820 = vpop.f32.mrb[0].mxu0
        %v821 = vadd.f32 %v709, %v820
        %v822 = vpop.f32.mrb[0].mxu0
        %823 = vmatprep.mubr.bf16.mxu0 0
        %824 = vmatmul.mubr.bf16.gmra.mrb[0].mxu0 %v684
        %v825 = vpop.f32.mrb[0].mxu0
        %v826 = vadd.f32 %v709, %v825
        %v827 = vpop.f32.mrb[0].mxu0
        %v828 = vpop.f32.mrb[0].mxu0
        %v829 = vadd.f32 %v709, %v828
        %v830 = vpop.f32.mrb[0].mxu0
        %831 = vmatprep.mubr.bf16.mxu0 0
        %832 = vmatmul.mubr.bf16.gmra.mrb[0].mxu0 %v685
        %v833 = vpop.f32.mrb[0].mxu0
        %v834 = vadd.f32 %v709, %v833
        %v835 = vpop.f32.mrb[0].mxu0
        %v836 = vpop.f32.mrb[0].mxu0
        %v837 = vadd.f32 %v709, %v836
        %v838 = vpop.f32.mrb[0].mxu0
        %839 = vmatprep.mubr.bf16.mxu0 0
        %840 = vmatmul.mubr.bf16.gmra.mrb[0].mxu0 %v686
        %v841 = vpop.f32.mrb[0].mxu0
        %v842 = vadd.f32 %v709, %v841
        %v843 = vpop.f32.mrb[0].mxu0
        %v844 = vpop.f32.mrb[0].mxu0
        %v845 = vadd.f32 %v709, %v844
        %v846 = vpop.f32.mrb[0].mxu0
        %847 = vmatprep.mubr.bf16.mxu0 0
        %848 = vmatmul.mubr.bf16.gmra.mrb[0].mxu0 %v687
        %v849 = vpop.f32.mrb[0].mxu0
        %v850 = vadd.f32 %v709, %v849
        %v851 = vpop.f32.mrb[0].mxu0
        %v852 = vpop.f32.mrb[0].mxu0
        %v853 = vadd.f32 %v709, %v852
        %v854 = vpop.f32.mrb[0].mxu0
        %855 = vdwg.mxu0
        %v856 = vmax.f32 %v794, 0.0
        %v857 = vmax.f32 %v797, 0.0
        %v858 = vmax.f32 %v802, 0.0
        %v859 = vmax.f32 %v805, 0.0
        %v860 = vmax.f32 %v810, 0.0
        %v861 = vmax.f32 %v813, 0.0
        %v862 = vmax.f32 %v818, 0.0
        %v863 = vmax.f32 %v821, 0.0
        %v864 = vmax.f32 %v826, 0.0
        %v865 = vmax.f32 %v829, 0.0
        %v866 = vmax.f32 %v834, 0.0
        %v867 = vmax.f32 %v837, 0.0
        %v868 = vmax.f32 %v842, 0.0
        %v869 = vmax.f32 %v845, 0.0
        %v870 = vmax.f32 %v850, 0.0
        %v871 = vmax.f32 %v853, 0.0
        %v872 = vpack.c.bf16 %v857, %v856
        %v873 = vpack.c.bf16 %v859, %v858
        %v874 = vpack.c.bf16 %v861, %v860
        %v875 = vpack.c.bf16 %v863, %v862
        %v876 = vpack.c.bf16 %v865, %v864
        %v877 = vpack.c.bf16 %v867, %v866
        %v878 = vpack.c.bf16 %v869, %v868
        %v879 = vpack.c.bf16 %v871, %v870
        %v880 = vld [vmem:[%s5] sm:$0xf]
        %v881 = vld [vmem:[%s5 + $0x4] sm:$0xf]
        %v882 = vld [vmem:[%s5 + $0x8] sm:$0xf]
        %v883 = vld [vmem:[%s5 + $0xc] sm:$0xf]
        %v884 = vld [vmem:[%s6] sm:$0x1]
        %v886 = vlaneseq
        %v887 = vshrl.u32 %v886, 7
        %v888 = vsub.s32 0, %v887
        %v889 = vrot.slane %v884, %v888
        %v895 = vunpack.c.l.b16 %v880
        %v896 = vunpack.c.l.b16 %v881
        %v897 = vunpack.c.l.b16 %v882
        %v898 = vunpack.c.l.b16 %v883
        %v899 = vpack.c.b16 %v896, %v895
        %v900 = vpack.c.b16 %v898, %v897
        %vm903 = vcmask 261120
        %v905 = vsel %vm903, %v872, 0
        %v908 = vsel %vm903, %v873, 0
        %v911 = vsel %vm903, %v874, 0
        %v914 = vsel %vm903, %v875, 0
        %v917 = vsel %vm903, %v876, 0
        %v920 = vsel %vm903, %v877, 0
        %v923 = vsel %vm903, %v878, 0
        %v926 = vsel %vm903, %v879, 0
        %928 = vmatprep.subr.bf16.mxu0 0
        %929 = vmatpush1.bf16.msra.mxu0 %v899
        %930 = vmatprep.subr.bf16.mxu0 0
        %931 = vmatpush1.bf16.msra.mxu0 %v900
        %932 = vmatprep.subr.bf16.mxu0 0
        %933 = vmatpush1.bf16.msra.mxu0 0
        %934 = vmatprep.subr.bf16.mxu0 0
        %935 = vmatpush1.bf16.msra.mxu0 0
        %936 = vmatprep.subr.bf16.mxu0 0
        %937 = vmatpush1.bf16.msra.mxu0 0
        %938 = vmatprep.subr.bf16.mxu0 0
        %939 = vmatpush1.bf16.msra.mxu0 0
        %940 = vmatprep.subr.bf16.mxu0 0
        %941 = vmatpush1.bf16.msra.mxu0 0
        %942 = vmatprep.subr.bf16.mxu0 0
        %943 = vmatpush1.bf16.msra.mxu0 0
        %944 = vmatprep.subr.bf16.mxu0 0
        %945 = vmatpush1.bf16.msra.mxu0 0
        %946 = vmatprep.subr.bf16.mxu0 0
        %947 = vmatpush1.bf16.msra.mxu0 0
        %948 = vmatprep.subr.bf16.mxu0 0
        %949 = vmatpush1.bf16.msra.mxu0 0
        %950 = vmatprep.subr.bf16.mxu0 0
        %951 = vmatpush1.bf16.msra.mxu0 0
        %952 = vmatprep.subr.bf16.mxu0 0
        %953 = vmatpush1.bf16.msra.mxu0 0
        %954 = vmatprep.subr.bf16.mxu0 0
        %955 = vmatpush1.bf16.msra.mxu0 0
        %956 = vmatprep.subr.bf16.mxu0 0
        %957 = vmatpush1.bf16.msra.mxu0 0
        %958 = vmatprep.subr.bf16.mxu0 0
        %959 = vmatpush1.bf16.msra.mxu0 0
        %960 = vmatprep.mubr.bf16.mxu0 0
        %961 = vmatmul.mubr.bf16.gmra.mrb[0].mxu0 %v905
        %v962 = vpop.f32.mrb[0].mxu0
        %v963 = vadd.f32 %v889, %v962
        %v964 = vpop.f32.mrb[0].mxu0
        %v965 = vpop.f32.mrb[0].mxu0
        %v966 = vadd.f32 %v889, %v965
        %v967 = vpop.f32.mrb[0].mxu0
        %968 = vmatprep.mubr.bf16.mxu0 0
        %969 = vmatmul.mubr.bf16.gmra.mrb[0].mxu0 %v908
        %v970 = vpop.f32.mrb[0].mxu0
        %v971 = vadd.f32 %v889, %v970
        %v972 = vpop.f32.mrb[0].mxu0
        %v973 = vpop.f32.mrb[0].mxu0
        %v974 = vadd.f32 %v889, %v973
        %v975 = vpop.f32.mrb[0].mxu0
        %976 = vmatprep.mubr.bf16.mxu0 0
        %977 = vmatmul.mubr.bf16.gmra.mrb[0].mxu0 %v911
        %v978 = vpop.f32.mrb[0].mxu0
        %v979 = vadd.f32 %v889, %v978
        %v980 = vpop.f32.mrb[0].mxu0
        %v981 = vpop.f32.mrb[0].mxu0
        %v982 = vadd.f32 %v889, %v981
        %v983 = vpop.f32.mrb[0].mxu0
        %984 = vmatprep.mubr.bf16.mxu0 0
        %985 = vmatmul.mubr.bf16.gmra.mrb[0].mxu0 %v914
        %v986 = vpop.f32.mrb[0].mxu0
        %v987 = vadd.f32 %v889, %v986
        %v988 = vpop.f32.mrb[0].mxu0
        %v989 = vpop.f32.mrb[0].mxu0
        %v990 = vadd.f32 %v889, %v989
        %v991 = vpop.f32.mrb[0].mxu0
        %992 = vmatprep.mubr.bf16.mxu0 0
        %993 = vmatmul.mubr.bf16.gmra.mrb[0].mxu0 %v917
        %v994 = vpop.f32.mrb[0].mxu0
        %v995 = vadd.f32 %v889, %v994
        %v996 = vpop.f32.mrb[0].mxu0
        %v997 = vpop.f32.mrb[0].mxu0
        %v998 = vadd.f32 %v889, %v997
        %v999 = vpop.f32.mrb[0].mxu0
        %1000 = vmatprep.mubr.bf16.mxu0 0
        %1001 = vmatmul.mubr.bf16.gmra.mrb[0].mxu0 %v920
        %v1002 = vpop.f32.mrb[0].mxu0
        %v1003 = vadd.f32 %v889, %v1002
        %v1004 = vpop.f32.mrb[0].mxu0
        %v1005 = vpop.f32.mrb[0].mxu0
        %v1006 = vadd.f32 %v889, %v1005
        %v1007 = vpop.f32.mrb[0].mxu0
        %1008 = vmatprep.mubr.bf16.mxu0 0
        %1009 = vmatmul.mubr.bf16.gmra.mrb[0].mxu0 %v923
        %v1010 = vpop.f32.mrb[0].mxu0
        %v1011 = vadd.f32 %v889, %v1010
        %v1012 = vpop.f32.mrb[0].mxu0
        %v1013 = vpop.f32.mrb[0].mxu0
        %v1014 = vadd.f32 %v889, %v1013
        %v1015 = vpop.f32.mrb[0].mxu0
        %1016 = vmatprep.mubr.bf16.mxu0 0
        %1017 = vmatmul.mubr.bf16.gmra.mrb[0].mxu0 %v926
        %v1018 = vpop.f32.mrb[0].mxu0
        %v1019 = vadd.f32 %v889, %v1018
        %v1020 = vpop.f32.mrb[0].mxu0
        %v1021 = vpop.f32.mrb[0].mxu0
        %v1022 = vadd.f32 %v889, %v1021
        %v1023 = vpop.f32.mrb[0].mxu0
        %1024 = vdwg.mxu0
        %v1025 = vmax.f32 %v963, 0.0
        %v1026 = vmax.f32 %v966, 0.0
        %v1027 = vmax.f32 %v971, 0.0
        %v1028 = vmax.f32 %v974, 0.0
        %v1029 = vmax.f32 %v979, 0.0
        %v1030 = vmax.f32 %v982, 0.0
        %v1031 = vmax.f32 %v987, 0.0
        %v1032 = vmax.f32 %v990, 0.0
        %v1033 = vmax.f32 %v995, 0.0
        %v1034 = vmax.f32 %v998, 0.0
        %v1035 = vmax.f32 %v1003, 0.0
        %v1036 = vmax.f32 %v1006, 0.0
        %v1037 = vmax.f32 %v1011, 0.0
        %v1038 = vmax.f32 %v1014, 0.0
        %v1039 = vmax.f32 %v1019, 0.0
        %v1040 = vmax.f32 %v1022, 0.0
        %v1041 = vpack.c.bf16 %v1026, %v1025
        %v1042 = vpack.c.bf16 %v1028, %v1027
        %v1043 = vpack.c.bf16 %v1030, %v1029
        %v1044 = vpack.c.bf16 %v1032, %v1031
        %v1045 = vpack.c.bf16 %v1034, %v1033
        %v1046 = vpack.c.bf16 %v1036, %v1035
        %v1047 = vpack.c.bf16 %v1038, %v1037
        %v1048 = vpack.c.bf16 %v1040, %v1039
        %v1049 = vld [vmem:[#allocation7] sm:$0xff]
        %v1050 = vld [vmem:[#allocation7 + $0x8] sm:$0xff]
        %v1051 = vld [vmem:[#allocation7 + $0x10] sm:$0xff]
        %v1052 = vld [vmem:[#allocation7 + $0x18] sm:$0xff]
        %v1053 = vld [vmem:[#allocation7 + $0x20] sm:$0xff]
        %v1054 = vld [vmem:[#allocation7 + $0x28] sm:$0xff]
        %v1055 = vld [vmem:[#allocation7 + $0x30] sm:$0xff]
        %v1056 = vld [vmem:[#allocation7 + $0x38] sm:$0xff]
        %v1057 = vld [vmem:[#allocation7 + $0x40] sm:$0xff]
        %v1058 = vld [vmem:[#allocation7 + $0x48] sm:$0xff]
        %v1059 = vld [vmem:[#allocation7 + $0x50] sm:$0xff]
        %v1060 = vld [vmem:[#allocation7 + $0x58] sm:$0xff]
        %v1061 = vld [vmem:[#allocation7 + $0x60] sm:$0xff]
        %v1062 = vld [vmem:[#allocation7 + $0x68] sm:$0xff]
        %v1063 = vld [vmem:[#allocation7 + $0x70] sm:$0xff]
        %v1064 = vld [vmem:[#allocation7 + $0x78] sm:$0xff]
        %v1065 = vld [vmem:[%s8] sm:$0x3]
        %v1067 = vlaneseq
        %v1068 = vshrl.u32 %v1067, 7
        %v1069 = vsub.s32 0, %v1068
        %v1070 = vrot.slane %v1065, %v1069
        %v1071 = vlaneseq
        %v1072 = vshrl.u32 %v1071, 7
        %v1073 = vsub.s32 1, %v1072
        %v1074 = vrot.slane %v1065, %v1073
        %v1093 = vunpack.c.l.b16 %v1049
        %v1094 = vunpack.c.h.b16 %v1049
        %v1095 = vunpack.c.l.b16 %v1050
        %v1096 = vunpack.c.h.b16 %v1050
        %v1097 = vunpack.c.l.b16 %v1051
        %v1098 = vunpack.c.h.b16 %v1051
        %v1099 = vunpack.c.l.b16 %v1052
        %v1100 = vunpack.c.h.b16 %v1052
        %v1101 = vunpack.c.l.b16 %v1053
        %v1102 = vunpack.c.h.b16 %v1053
        %v1103 = vunpack.c.l.b16 %v1054
        %v1104 = vunpack.c.h.b16 %v1054
        %v1105 = vunpack.c.l.b16 %v1055
        %v1106 = vunpack.c.h.b16 %v1055
        %v1107 = vunpack.c.l.b16 %v1056
        %v1108 = vunpack.c.h.b16 %v1056
        %v1109 = vunpack.c.l.b16 %v1057
        %v1110 = vunpack.c.h.b16 %v1057
        %v1111 = vunpack.c.l.b16 %v1058
        %v1112 = vunpack.c.h.b16 %v1058
        %v1113 = vunpack.c.l.b16 %v1059
        %v1114 = vunpack.c.h.b16 %v1059
        %v1115 = vunpack.c.l.b16 %v1060
        %v1116 = vunpack.c.h.b16 %v1060
        %v1117 = vunpack.c.l.b16 %v1061
        %v1118 = vunpack.c.h.b16 %v1061
        %v1119 = vunpack.c.l.b16 %v1062
        %v1120 = vunpack.c.h.b16 %v1062
        %v1121 = vunpack.c.l.b16 %v1063
        %v1122 = vunpack.c.h.b16 %v1063
        %v1123 = vunpack.c.l.b16 %v1064
        %v1124 = vunpack.c.h.b16 %v1064
        %v1125 = vpack.c.b16 %v1095, %v1093
        %v1126 = vpack.c.b16 %v1096, %v1094
        %v1127 = vpack.c.b16 %v1099, %v1097
        %v1128 = vpack.c.b16 %v1100, %v1098
        %v1129 = vpack.c.b16 %v1103, %v1101
        %v1130 = vpack.c.b16 %v1104, %v1102
        %v1131 = vpack.c.b16 %v1107, %v1105
        %v1132 = vpack.c.b16 %v1108, %v1106
        %v1133 = vpack.c.b16 %v1111, %v1109
        %v1134 = vpack.c.b16 %v1112, %v1110
        %v1135 = vpack.c.b16 %v1115, %v1113
        %v1136 = vpack.c.b16 %v1116, %v1114
        %v1137 = vpack.c.b16 %v1119, %v1117
        %v1138 = vpack.c.b16 %v1120, %v1118
        %v1139 = vpack.c.b16 %v1123, %v1121
        %v1140 = vpack.c.b16 %v1124, %v1122
        %1157 = vmatprep.subr.bf16.mxu0 %v1126
        %1158 = vmatpush1.bf16.msra.mxu0 %v1125
        %1159 = vmatprep.subr.bf16.mxu0 %v1128
        %1160 = vmatpush1.bf16.msra.mxu0 %v1127
        %1161 = vmatprep.subr.bf16.mxu0 %v1130
        %1162 = vmatpush1.bf16.msra.mxu0 %v1129
        %1163 = vmatprep.subr.bf16.mxu0 %v1132
        %1164 = vmatpush1.bf16.msra.mxu0 %v1131
        %1165 = vmatprep.subr.bf16.mxu0 %v1134
        %1166 = vmatpush1.bf16.msra.mxu0 %v1133
        %1167 = vmatprep.subr.bf16.mxu0 %v1136
        %1168 = vmatpush1.bf16.msra.mxu0 %v1135
        %1169 = vmatprep.subr.bf16.mxu0 %v1138
        %1170 = vmatpush1.bf16.msra.mxu0 %v1137
        %1171 = vmatprep.subr.bf16.mxu0 %v1140
        %1172 = vmatpush1.bf16.msra.mxu0 %v1139
        %1173 = vmatprep.subr.bf16.mxu0 0
        %1174 = vmatpush1.bf16.msra.mxu0 0
        %1175 = vmatprep.subr.bf16.mxu0 0
        %1176 = vmatpush1.bf16.msra.mxu0 0
        %1177 = vmatprep.subr.bf16.mxu0 0
        %1178 = vmatpush1.bf16.msra.mxu0 0
        %1179 = vmatprep.subr.bf16.mxu0 0
        %1180 = vmatpush1.bf16.msra.mxu0 0
        %1181 = vmatprep.subr.bf16.mxu0 0
        %1182 = vmatpush1.bf16.msra.mxu0 0
        %1183 = vmatprep.subr.bf16.mxu0 0
        %1184 = vmatpush1.bf16.msra.mxu0 0
        %1185 = vmatprep.subr.bf16.mxu0 0
        %1186 = vmatpush1.bf16.msra.mxu0 0
        %1187 = vmatprep.subr.bf16.mxu0 0
        %1188 = vmatpush1.bf16.msra.mxu0 0
        %1189 = vmatprep.mubr.bf16.mxu0 0
        %1190 = vmatmul.mubr.bf16.gmra.mrb[0].mxu0 %v1041
        %v1191 = vpop.f32.mrb[0].mxu0
        %v1192 = vadd.f32 %v1070, %v1191
        %v1193 = vpop.f32.mrb[0].mxu0
        %v1194 = vadd.f32 %v1074, %v1193
        %v1195 = vpop.f32.mrb[0].mxu0
        %v1196 = vadd.f32 %v1070, %v1195
        %v1197 = vpop.f32.mrb[0].mxu0
        %v1198 = vadd.f32 %v1074, %v1197
        %1199 = vmatprep.mubr.bf16.mxu0 0
        %1200 = vmatmul.mubr.bf16.gmra.mrb[0].mxu0 %v1042
        %v1201 = vpop.f32.mrb[0].mxu0
        %v1202 = vadd.f32 %v1070, %v1201
        %v1203 = vpop.f32.mrb[0].mxu0
        %v1204 = vadd.f32 %v1074, %v1203
        %v1205 = vpop.f32.mrb[0].mxu0
        %v1206 = vadd.f32 %v1070, %v1205
        %v1207 = vpop.f32.mrb[0].mxu0
        %v1208 = vadd.f32 %v1074, %v1207
        %1209 = vmatprep.mubr.bf16.mxu0 0
        %1210 = vmatmul.mubr.bf16.gmra.mrb[0].mxu0 %v1043
        %v1211 = vpop.f32.mrb[0].mxu0
        %v1212 = vadd.f32 %v1070, %v1211
        %v1213 = vpop.f32.mrb[0].mxu0
        %v1214 = vadd.f32 %v1074, %v1213
        %v1215 = vpop.f32.mrb[0].mxu0
        %v1216 = vadd.f32 %v1070, %v1215
        %v1217 = vpop.f32.mrb[0].mxu0
        %v1218 = vadd.f32 %v1074, %v1217
        %1219 = vmatprep.mubr.bf16.mxu0 0
        %1220 = vmatmul.mubr.bf16.gmra.mrb[0].mxu0 %v1044
        %v1221 = vpop.f32.mrb[0].mxu0
        %v1222 = vadd.f32 %v1070, %v1221
        %v1223 = vpop.f32.mrb[0].mxu0
        %v1224 = vadd.f32 %v1074, %v1223
        %v1225 = vpop.f32.mrb[0].mxu0
        %v1226 = vadd.f32 %v1070, %v1225
        %v1227 = vpop.f32.mrb[0].mxu0
        %v1228 = vadd.f32 %v1074, %v1227
        %1229 = vmatprep.mubr.bf16.mxu0 0
        %1230 = vmatmul.mubr.bf16.gmra.mrb[0].mxu0 %v1045
        %v1231 = vpop.f32.mrb[0].mxu0
        %v1232 = vadd.f32 %v1070, %v1231
        %v1233 = vpop.f32.mrb[0].mxu0
        %v1234 = vadd.f32 %v1074, %v1233
        %v1235 = vpop.f32.mrb[0].mxu0
        %v1236 = vadd.f32 %v1070, %v1235
        %v1237 = vpop.f32.mrb[0].mxu0
        %v1238 = vadd.f32 %v1074, %v1237
        %1239 = vmatprep.mubr.bf16.mxu0 0
        %1240 = vmatmul.mubr.bf16.gmra.mrb[0].mxu0 %v1046
        %v1241 = vpop.f32.mrb[0].mxu0
        %v1242 = vadd.f32 %v1070, %v1241
        %v1243 = vpop.f32.mrb[0].mxu0
        %v1244 = vadd.f32 %v1074, %v1243
        %v1245 = vpop.f32.mrb[0].mxu0
        %v1246 = vadd.f32 %v1070, %v1245
        %v1247 = vpop.f32.mrb[0].mxu0
        %v1248 = vadd.f32 %v1074, %v1247
        %1249 = vmatprep.mubr.bf16.mxu0 0
        %1250 = vmatmul.mubr.bf16.gmra.mrb[0].mxu0 %v1047
        %v1251 = vpop.f32.mrb[0].mxu0
        %v1252 = vadd.f32 %v1070, %v1251
        %v1253 = vpop.f32.mrb[0].mxu0
        %v1254 = vadd.f32 %v1074, %v1253
        %v1255 = vpop.f32.mrb[0].mxu0
        %v1256 = vadd.f32 %v1070, %v1255
        %v1257 = vpop.f32.mrb[0].mxu0
        %v1258 = vadd.f32 %v1074, %v1257
        %1259 = vmatprep.mubr.bf16.mxu0 0
        %1260 = vmatmul.mubr.bf16.gmra.mrb[0].mxu0 %v1048
        %v1261 = vpop.f32.mrb[0].mxu0
        %v1262 = vadd.f32 %v1070, %v1261
        %v1263 = vpop.f32.mrb[0].mxu0
        %v1264 = vadd.f32 %v1074, %v1263
        %v1265 = vpop.f32.mrb[0].mxu0
        %v1266 = vadd.f32 %v1070, %v1265
        %v1267 = vpop.f32.mrb[0].mxu0
        %v1268 = vadd.f32 %v1074, %v1267
        %1269 = vdwg.mxu0
        %v1270 = vmax.f32 %v1192, 0.0
        %v1271 = vmax.f32 %v1194, 0.0
        %v1272 = vmax.f32 %v1196, 0.0
        %v1273 = vmax.f32 %v1198, 0.0
        %v1274 = vmax.f32 %v1202, 0.0
        %v1275 = vmax.f32 %v1204, 0.0
        %v1276 = vmax.f32 %v1206, 0.0
        %v1277 = vmax.f32 %v1208, 0.0
        %v1278 = vmax.f32 %v1212, 0.0
        %v1279 = vmax.f32 %v1214, 0.0
        %v1280 = vmax.f32 %v1216, 0.0
        %v1281 = vmax.f32 %v1218, 0.0
        %v1282 = vmax.f32 %v1222, 0.0
        %v1283 = vmax.f32 %v1224, 0.0
        %v1284 = vmax.f32 %v1226, 0.0
        %v1285 = vmax.f32 %v1228, 0.0
        %v1286 = vmax.f32 %v1232, 0.0
        %v1287 = vmax.f32 %v1234, 0.0
        %v1288 = vmax.f32 %v1236, 0.0
        %v1289 = vmax.f32 %v1238, 0.0
        %v1290 = vmax.f32 %v1242, 0.0
        %v1291 = vmax.f32 %v1244, 0.0
        %v1292 = vmax.f32 %v1246, 0.0
        %v1293 = vmax.f32 %v1248, 0.0
        %v1294 = vmax.f32 %v1252, 0.0
        %v1295 = vmax.f32 %v1254, 0.0
        %v1296 = vmax.f32 %v1256, 0.0
        %v1297 = vmax.f32 %v1258, 0.0
        %v1298 = vmax.f32 %v1262, 0.0
        %v1299 = vmax.f32 %v1264, 0.0
        %v1300 = vmax.f32 %v1266, 0.0
        %v1301 = vmax.f32 %v1268, 0.0
        %1302 = vst [vmem:[%s380] sm:$0xff] %v1270
        %1303 = vst [vmem:[%s380 + $0x8] sm:$0xff] %v1271
        %1304 = vst [vmem:[%s380 + $0x10] sm:$0xff] %v1272
        %1305 = vst [vmem:[%s380 + $0x18] sm:$0xff] %v1273
        %1306 = vst [vmem:[%s380 + $0x20] sm:$0xff] %v1274
        %1307 = vst [vmem:[%s380 + $0x28] sm:$0xff] %v1275
        %1308 = vst [vmem:[%s380 + $0x30] sm:$0xff] %v1276
        %1309 = vst [vmem:[%s380 + $0x38] sm:$0xff] %v1277
        %1310 = vst [vmem:[%s380 + $0x40] sm:$0xff] %v1278
        %1311 = vst [vmem:[%s380 + $0x48] sm:$0xff] %v1279
        %1312 = vst [vmem:[%s380 + $0x50] sm:$0xff] %v1280
        %1313 = vst [vmem:[%s380 + $0x58] sm:$0xff] %v1281
        %1314 = vst [vmem:[%s380 + $0x60] sm:$0xff] %v1282
        %1315 = vst [vmem:[%s380 + $0x68] sm:$0xff] %v1283
        %1316 = vst [vmem:[%s380 + $0x70] sm:$0xff] %v1284
        %1317 = vst [vmem:[%s380 + $0x78] sm:$0xff] %v1285
        %1318 = vst [vmem:[%s380 + $0x80] sm:$0xff] %v1286
        %1319 = vst [vmem:[%s380 + $0x88] sm:$0xff] %v1287
        %1320 = vst [vmem:[%s380 + $0x90] sm:$0xff] %v1288
        %1321 = vst [vmem:[%s380 + $0x98] sm:$0xff] %v1289
        %1322 = vst [vmem:[%s380 + $0xa0] sm:$0xff] %v1290
        %1323 = vst [vmem:[%s380 + $0xa8] sm:$0xff] %v1291
        %1324 = vst [vmem:[%s380 + $0xb0] sm:$0xff] %v1292
        %1325 = vst [vmem:[%s380 + $0xb8] sm:$0xff] %v1293
        %1326 = vst [vmem:[%s380 + $0xc0] sm:$0xff] %v1294
        %1327 = vst [vmem:[%s380 + $0xc8] sm:$0xff] %v1295
        %1328 = vst [vmem:[%s380 + $0xd0] sm:$0xff] %v1296
        %1329 = vst [vmem:[%s380 + $0xd8] sm:$0xff] %v1297
        %1330 = vst [vmem:[%s380 + $0xe0] sm:$0xff] %v1298
        %1331 = vst [vmem:[%s380 + $0xe8] sm:$0xff] %v1299
        %1332 = vst [vmem:[%s380 + $0xf0] sm:$0xff] %v1300
        %1333 = vst [vmem:[%s380 + $0xf8] sm:$0xff] %v1301
        %s1334 = sand.u32 %s229, 1
        %s1335 = scalar_lea.sflag [#allocation4], %s1334
        %s1336 = sand.u32 %s229, 1
        %s1337 = smul.addr %s1336, 256
        %s1338 = scalar_lea.vmem [#allocation8], %s1337
        // Predicated region
        $region69: #{tpu_custom_call.1} parent=55 // pred_check
          %p1339 = pneg %p239
        $region70: #{tpu_custom_call.1} parent=55 // pred_check_branch
          %1341 = sbr.rel (%p1339) target = $region72
        $region71: #{tpu_custom_call.1} parent=55 // pred_region
          %s1342 = smul.u32 16, %s27
          %s1344 = ssub.s32 4096, 4096
          %1345 = vsyncadd %s1335, %s1344
          %s1346 = smul.addr %s1342, 2
          %s1347 = smul.addr %s1346, 128
          %s1348 = scalar_lea.hbm %s9, %s1347
          %s1349 = sshll.u32 %s1338, 4
          %s1350 = int_to_ptr.vmem [resolvable:$true] %s1349
          %1355 = dma.vmem_to_hbm [thread:$0]  %s1350, 4096, %s1348, %s1335, 256, 256, 16
        $region72: #{tpu_custom_call.1} parent=55 // pred_fallthru
          _
      $region56: #{tpu_custom_call.1} parent=5 // pred_fallthru
        _
      %p1356 = scmp.le.s32.totalorder 2, %s22
      // Predicated region
      $region73: #{tpu_custom_call.1} parent=5 // pred_check
        %p1357 = pneg %p1356
      $region74: #{tpu_custom_call.1} parent=5 // pred_check_branch
        %1359 = sbr.rel (%p1357) target = $region76
      $region75: #{tpu_custom_call.1} parent=5 // pred_region
        %s1360 = ssub.s32 %s22, 2
        // Predicated region
        $region77: #{tpu_custom_call.1} parent=75 // pred_check
          %p1361 = pneg %p245
        $region78: #{tpu_custom_call.1} parent=75 // pred_check_branch
          %1363 = sbr.rel (%p1361) target = $region80
        $region79: #{tpu_custom_call.1} parent=75 // pred_region
          %s1364 = sand.u32 %s230, 1
          %s1365 = scalar_lea.sflag [#allocation4], %s1364
          %s1366 = sand.u32 %s230, 1
          %s1367 = smul.addr %s1366, 256
          %s1368 = scalar_lea.vmem [#allocation8], %s1367
          %1369 = dma.done %s1365, 4096
        $region80: #{tpu_custom_call.1} parent=75 // pred_fallthru
          _
      $region76: #{tpu_custom_call.1} parent=5 // pred_fallthru
        _
    $region6: #{tpu_custom_call.1} parent=1 // loop_footer
      %s26 = sadd.s32 1, %s22
    $region7: #{tpu_custom_call.1} parent=1 // loop_footer_branch
      %21 = sbr.rel target = $region3
    $region8: #{tpu_custom_call.1} parent=1 // loop_exit
      _
    %1370 = vsyncpa [#allocation3], 1
    %s1371 = scalar_lea.sflag [#allocation3], 1
    %1372 = vsyncpa %s1371, 1
    %1373 = vsyncpa [#allocation6], 1
    %1374 = vsyncpa [#allocation4], 1
    %s1375 = scalar_lea.sflag [#allocation4], 1
    %1376 = vsyncpa %s1375, 1

</llo_original>
